<compile_context>
chip_gen: v7x
topology: tpu7x:2x2x1
jax: 0.10.0
libtpu: 0.0.40
codegen_flags: <defaults>
</compile_context>

<pallas_src>
import functools

import jax
import jax.numpy as jnp
from jax import lax
from jax.experimental import pallas as pl
from jax.experimental.pallas import tpu as pltpu

SUBLANE = 8
# Below this many multiply-accumulates the pallas_call is pure launch/DMA
# overhead -> use a fused XLA dot instead.
_FAST_PATH_MAX_MACS = 1 << 23  # ~8M MACs


def _round_up(v, m):
    return (v + m - 1) // m * m


def _vmem_cap_bytes():
    try:
        return int(pltpu.get_tpu_info().vmem_capacity_bytes)
    except Exception:
        return 64 << 20  # conservative default (v7x per-TensorCore VMEM)


def _linear_kernel(x_ref, w_ref, b_ref, o_ref):
    # x: [TM, K] f32 row tile, w: [N, K] bf16 (resident), b: [1, N] f32 (resident)
    x = x_ref[...].astype(jnp.bfloat16)  # in-kernel cast rides free VPU slots
    acc = lax.dot_general(
        x, w_ref[...],
        dimension_numbers=(((1,), (1,)), ((), ())),  # contract K of both (w is [N, K])
        preferred_element_type=jnp.float32)
    o_ref[...] = acc + b_ref[...]


def _pallas_linear(x2d, w_bf16, b2d, tile_m):
    M, K = x2d.shape
    N = w_bf16.shape[0]

    # MXU/vreg-friendly row tile: multiple of 16 (bf16 sublane pairs), prefer
    # 256-granules (v6e/v7x 2x256x256 MXU); never much larger than M itself.
    tm = _round_up(max(16, min(tile_m, M)), 16)
    if tm >= 256:
        tm = _round_up(tm, 256)

    grid = (pl.cdiv(M, tm),)  # ragged last tile is masked by Pallas

    # VMEM budget: double-buffered f32 x tile + resident bf16 weight + f32 bias
    # + double-buffered f32 out tile, with headroom for Mosaic internal scratch.
    need = 2 * tm * K * 4 + 2 * N * K * 2 + 2 * N * 4 + 2 * tm * N * 4
    need = int(need * 1.5) + (4 << 20)
    vmem_limit = min(int(_vmem_cap_bytes() * 0.75), max(need, 16 << 20))

    return pl.pallas_call(
        _linear_kernel,
        out_shape=jax.ShapeDtypeStruct((M, N), jnp.float32),
        grid_spec=pltpu.PrefetchScalarGridSpec(
            num_scalar_prefetch=0,
            grid=grid,
            in_specs=[
                pl.BlockSpec((tm, K), lambda i: (i, 0)),  # row tile of x (f32)
                pl.BlockSpec((N, K), lambda i: (0, 0)),   # weight, native [N,K], resident
                pl.BlockSpec((1, N), lambda i: (0, 0)),   # bias, resident
            ],
            out_specs=pl.BlockSpec((tm, N), lambda i: (i, 0)),
        ),
        compiler_params=pltpu.CompilerParams(
            dimension_semantics=("parallel",),  # shard M tiles across v7x's 2 TCs
            vmem_limit_bytes=vmem_limit,
        ),
        cost_estimate=pl.CostEstimate(
            flops=2 * M * K * N,
            transcendentals=0,
            bytes_accessed=M * K * 4 + N * K * 2 + N * 4 + M * N * 4,
        ),
    )(x2d, w_bf16, b2d)


@functools.partial(jax.jit, static_argnames=("tile_m",))
def j_score_forward(x, w, b, *, tile_m=256):
    """PyTorch J_Score.forward == nn.Linear: y = x @ w.T + b.

    x: [..., K] f32, w: [N, K] f32 (PyTorch Linear weight layout), b: [N] f32.
    Returns: [..., N] f32.  (The module's LeakyReLU is never applied in forward.)
    """
    K = x.shape[-1]
    N, Kw = w.shape
    assert K == Kw and b.shape == (N,)

    lead = x.shape[:-1]
    x2d = x.reshape(-1, K)
    M = x2d.shape[0]

    if M * K * N <= _FAST_PATH_MAX_MACS:
        # Tiny problem (e.g. the literal J_Score 8x32x16 case): a fused XLA dot
        # beats any pallas_call here on every generation; stays pure f32.
        y = x2d @ w.T + b
    else:
        y = _pallas_linear(
            x2d,
            w.astype(jnp.bfloat16),                  # fused under jit; resident in VMEM
            b.astype(jnp.float32).reshape(1, N),
            tile_m,
        )

    return y.reshape(*lead, N)


if __name__ == "__main__":
    key = jax.random.PRNGKey(0)
    k1, k2, k3, k4, k5, k6 = jax.random.split(key, 6)

    # --- (1) Pallas path: shape large enough that the tiled kernel is used ---
    M, K, N = 512, 256, 128
    x = jax.random.normal(k1, (M, K), jnp.float32)
    bound = 1.0 / (K ** 0.5)  # PyTorch nn.Linear default init range
    w = jax.random.uniform(k2, (N, K), jnp.float32, -bound, bound)
    b = jax.random.uniform(k3, (N,), jnp.float32, -bound, bound)

    y = jax.block_until_ready(j_score_forward(x, w, b))
    ref = x @ w.T + b
    assert y.shape == (M, N), y.shape
    assert bool(jnp.all(jnp.isfinite(y)))
    max_err = float(jnp.max(jnp.abs(y - ref)))
    assert max_err < 5e-2, max_err  # bf16 operands, f32 accumulation

    # --- (2) XLA fast path at the actual (tiny) J_Score shapes ---
    batch, input_size, output_size = 8, 32, 16
    x2 = jax.random.normal(k4, (batch, input_size), jnp.float32)
    bound2 = 1.0 / (input_size ** 0.5)
    w2 = jax.random.uniform(k5, (output_size, input_size), jnp.float32, -bound2, bound2)
    b2 = jax.random.uniform(k6, (output_size,), jnp.float32, -bound2, bound2)

    y2 = jax.block_until_ready(j_score_forward(x2, w2, b2))
    ref2 = x2 @ w2.T + b2
    assert y2.shape == (batch, output_size), y2.shape
    max_err2 = float(jnp.max(jnp.abs(y2 - ref2)))
    assert max_err2 < 1e-5, max_err2  # pure f32 path

    print("KERNEL_OK")
</pallas_src>

<mosaic_0001>
module attributes {stable_mosaic.version = 11 : i64} {
  func.func @_linear_kernel(%arg0: i32, %arg1: memref<256x256xf32, #tpu.memory_space<vmem>>, %arg2: memref<128x256xbf16, #tpu.memory_space<vmem>>, %arg3: memref<1x128xf32, #tpu.memory_space<vmem>>, %arg4: memref<256x128xf32, #tpu.memory_space<vmem>>) attributes {dimension_semantics = [#tpu.dimension_semantics<parallel>], iteration_bounds = array<i64: 2>, scalar_prefetch = 0 : i64, scratch_operands = 0 : i64, tpu.core_type = #tpu.core_type<tc>, window_params = [{transform_indices = @transform_0, window_bounds = array<i64: 256, 256>}, {pipeline_mode = #tpu.pipeline_mode<synchronous>, transform_indices = @transform_1, window_bounds = array<i64: 128, 256>}, {pipeline_mode = #tpu.pipeline_mode<synchronous>, transform_indices = @transform_2, window_bounds = array<i64: 1, 128>}, {transform_indices = @transform_3, window_bounds = array<i64: 256, 128>}]} {
    %c0 = arith.constant 0 : index
    %c0_0 = arith.constant 0 : index
    %0 = vector.load %arg1[%c0, %c0_0] : memref<256x256xf32, #tpu.memory_space<vmem>>, vector<256x256xf32>
    %1 = arith.truncf %0 : vector<256x256xf32> to vector<256x256xbf16>
    %c0_1 = arith.constant 0 : index
    %c0_2 = arith.constant 0 : index
    %2 = vector.load %arg2[%c0_1, %c0_2] : memref<128x256xbf16, #tpu.memory_space<vmem>>, vector<128x256xbf16>
    %cst = arith.constant dense<0.000000e+00> : vector<256x128xf32>
    %3 = tpu.matmul %1, %2, %cst {dimension_numbers = #tpu.dot_dimension_numbers<[1], [1], [0], [0], [0, 0, 1, 0], [], []>} : vector<256x256xbf16>, vector<128x256xbf16>, vector<256x128xf32> -> vector<256x128xf32>
    %c0_3 = arith.constant 0 : index
    %c0_4 = arith.constant 0 : index
    %4 = vector.load %arg3[%c0_3, %c0_4] : memref<1x128xf32, #tpu.memory_space<vmem>>, vector<1x128xf32>
    %5 = vector.broadcast %4 : vector<1x128xf32> to vector<256x128xf32>
    %6 = arith.addf %3, %5 : vector<256x128xf32>
    %c0_5 = arith.constant 0 : index
    %c0_6 = arith.constant 0 : index
    %7 = vector.load %arg4[%c0_5, %c0_6] : memref<256x128xf32, #tpu.memory_space<vmem>>, vector<256x128xf32>
    tpu.vector_store %arg4[%c0_5, %c0_6], %6 {strides = array<i32>} : memref<256x128xf32, #tpu.memory_space<vmem>>, vector<256x128xf32>,
    return
  }
  func.func @transform_0(%arg0: i32) -> (i32, i32) {
    %c0_i32 = arith.constant 0 : i32
    %c0_i32_0 = arith.constant 0 : i32
    return %arg0, %c0_i32 : i32, i32
  }
  func.func @transform_1(%arg0: i32) -> (i32, i32) {
    %c0_i32 = arith.constant 0 : i32
    %c0_i32_0 = arith.constant 0 : i32
    %c0_i32_1 = arith.constant 0 : i32
    return %c0_i32, %c0_i32_0 : i32, i32
  }
  func.func @transform_2(%arg0: i32) -> (i32, i32) {
    %c0_i32 = arith.constant 0 : i32
    %c0_i32_0 = arith.constant 0 : i32
    %c0_i32_1 = arith.constant 0 : i32
    return %c0_i32, %c0_i32_0 : i32, i32
  }
  func.func @transform_3(%arg0: i32) -> (i32, i32) {
    %c0_i32 = arith.constant 0 : i32
    %c0_i32_0 = arith.constant 0 : i32
    return %arg0, %c0_i32 : i32, i32
  }
}

</mosaic_0001>

<llo_original>
// kernel: j_score_forward.1
$region0: #{j_score_forward.1}
  #allocation0 [shape = 'u32[]', space=smem, size = 0x4, offset = 0x4, fixed_abs, tag = 'smem constant byte address 0x4 - core index']
  #allocation1 [shape = 'u32[144,128]{1,0:T(1,128)}', space=vmem, size = 0x12000, scoped, tag = 'internal scratch']
  %s0 = inlined_call_operand.hbm [shape: f32[512,256], index: 0, kind: input, shape index: {}]
  %s1 = inlined_call_operand.vmem [shape: bf16[128,256], index: 1, kind: input, shape index: {}]
  %s2 = inlined_call_operand.vmem [shape: f32[1,128], index: 2, kind: input, shape index: {}]
  %s3 = inlined_call_operand.hbm [shape: f32[512,128], index: 3, kind: output, shape index: {}]
  %s4 = sld [smem:[#allocation0]]
  $region49: #{j_score_forward.1} parent=0
    _
  %s6 = ssub.s32 1, %s4
  %s7 = scalar_select 0, %s6, %s4
  $region1: #{j_score_forward.1} parent=0
    #allocation2 [shape = 'u8[524288]{0}', space=vmem, size = 0x80000, scoped, tag = 'input window, operand 0']
    #allocation3 [shape = 's32[2]{0}', space=sflag, size = 0x8, scoped, tag = 'scoped memory for j_score_forward.1']
    #allocation4 [shape = 's32[2]{0}', space=sflag, size = 0x8, scoped, tag = 'scoped memory for j_score_forward.1']
    #allocation5 [shape = 'u8[262144]{0}', space=vmem, size = 0x40000, scoped, tag = 'output window, operand 0']
    %8 = vsyncpa [#allocation3], 0
    %s9 = scalar_lea.sflag [#allocation3], 1
    %10 = vsyncpa %s9, 0
    %11 = vsyncpa [#allocation4], 0
    %s12 = scalar_lea.sflag [#allocation4], 1
    %13 = vsyncpa %s12, 0
    loop: start=0, step=1, limit=4
    $region2: #{j_score_forward.1} parent=1 // loop_pre_header
      _
    $region3: #{j_score_forward.1} parent=1 // loop_header
      %s15 = sphi 0, %s19
      %p16 = scmp.ge.s32.totalorder %s15, 4
      %s25 = sphi 0, %s27
      %s28 = sphi 0, %s25
      %s29 = sphi 0, %s28
      %s45 = sphi 0, %s29
      %s49 = sphi 0, %s49
      %s51 = sphi 0, %s49
      %s52 = sphi 0, %s51
      %s66 = sphi 0, %s52
      %s70 = sphi 0, %s70
      %s72 = sphi 0, %s70
      %s73 = sphi 0, %s72
      %s87 = sphi 0, %s73
      %s93 = sphi 0, %s95
      %s96 = sphi 0, %s93
      %s97 = sphi 0, %s96
      %s113 = sphi 0, %s97
    $region4: #{j_score_forward.1} parent=1 // loop_header_branch
      %18 = sbr.rel (%p16) target = $region8
    $region5: #{j_score_forward.1} parent=1 // loop_body
      %s20 = ssub.s32 %s15, 1
      %s21 = ssub.s32 %s15, 2
      %s22 = sadd.s32 %s15, 1
      %s23 = ssub.s32 %s15, %s22
      %p24 = scmp.eq.s32.totalorder %s23, 0
      %s26 = sadd.s32 %s25, 1
      %s27 = scalar_select %p24, %s25, %s26
      %p30 = pneg %p24
      %p31 = scmp.eq.s32.totalorder %s15, 1
      %p32 = por %p30, %p31
      %p33 = scmp.ne.s32.totalorder %s25, %s28
      %p34 = scmp.eq.s32.totalorder %s15, 0
      %p35 = por %p33, %p34
      %p36 = scmp.ne.s32.totalorder %s25, %s28
      %p37 = scmp.eq.s32.totalorder %s20, 1
      %p38 = por %p36, %p37
      %p39 = scmp.ne.s32.totalorder %s28, %s29
      %p40 = scmp.eq.s32.totalorder %s20, 0
      %p41 = por %p39, %p40
      %p42 = scmp.ne.s32.totalorder %s28, %s29
      %p43 = scmp.eq.s32.totalorder %s21, 1
      %p44 = por %p42, %p43
      %p46 = scmp.ne.s32.totalorder %s29, %s45
      %p47 = scmp.eq.s32.totalorder %s21, 0
      %p48 = por %p46, %p47
      %s50 = sadd.s32 %s49, 1
      %p53 = scmp.eq.s32.totalorder %s15, 1
      %p54 = scmp.ne.s32.totalorder %s49, %s51
      %p55 = scmp.eq.s32.totalorder %s15, 0
      %p56 = por %p54, %p55
      %p57 = scmp.ne.s32.totalorder %s49, %s51
      %p58 = scmp.eq.s32.totalorder %s20, 1
      %p59 = por %p57, %p58
      %p60 = scmp.ne.s32.totalorder %s51, %s52
      %p61 = scmp.eq.s32.totalorder %s20, 0
      %p62 = por %p60, %p61
      %p63 = scmp.ne.s32.totalorder %s51, %s52
      %p64 = scmp.eq.s32.totalorder %s21, 1
      %p65 = por %p63, %p64
      %p67 = scmp.ne.s32.totalorder %s52, %s66
      %p68 = scmp.eq.s32.totalorder %s21, 0
      %p69 = por %p67, %p68
      %s71 = sadd.s32 %s70, 1
      %p74 = scmp.eq.s32.totalorder %s15, 1
      %p75 = scmp.ne.s32.totalorder %s70, %s72
      %p76 = scmp.eq.s32.totalorder %s15, 0
      %p77 = por %p75, %p76
      %p78 = scmp.ne.s32.totalorder %s70, %s72
      %p79 = scmp.eq.s32.totalorder %s20, 1
      %p80 = por %p78, %p79
      %p81 = scmp.ne.s32.totalorder %s72, %s73
      %p82 = scmp.eq.s32.totalorder %s20, 0
      %p83 = por %p81, %p82
      %p84 = scmp.ne.s32.totalorder %s72, %s73
      %p85 = scmp.eq.s32.totalorder %s21, 1
      %p86 = por %p84, %p85
      %p88 = scmp.ne.s32.totalorder %s73, %s87
      %p89 = scmp.eq.s32.totalorder %s21, 0
      %p90 = por %p88, %p89
      %s91 = ssub.s32 %s15, %s22
      %p92 = scmp.eq.s32.totalorder %s91, 0
      %s94 = sadd.s32 %s93, 1
      %s95 = scalar_select %p92, %s93, %s94
      %p98 = pneg %p92
      %p99 = scmp.eq.s32.totalorder %s15, 1
      %p100 = por %p98, %p99
      %p101 = scmp.ne.s32.totalorder %s93, %s96
      %p102 = scmp.eq.s32.totalorder %s15, 0
      %p103 = por %p101, %p102
      %p104 = scmp.ne.s32.totalorder %s93, %s96
      %p105 = scmp.eq.s32.totalorder %s20, 1
      %p106 = por %p104, %p105
      %p107 = scmp.ne.s32.totalorder %s96, %s97
      %p108 = scmp.eq.s32.totalorder %s20, 0
      %p109 = por %p107, %p108
      %p110 = scmp.ne.s32.totalorder %s96, %s97
      %p111 = scmp.eq.s32.totalorder %s21, 1
      %p112 = por %p110, %p111
      %p114 = scmp.ne.s32.totalorder %s97, %s113
      %p115 = scmp.eq.s32.totalorder %s21, 0
      %p116 = por %p114, %p115
      %p117 = scmp.le.s32.totalorder 1, %s15
      %p118 = scmp.lt.s32.totalorder %s15, 3
      %p119 = pnand %p117, %p118
      %p120 = pneg %p119
      // Predicated region
      $region9: #{j_score_forward.1} parent=5 // pred_check
        _
      $region10: #{j_score_forward.1} parent=5 // pred_check_branch
        %122 = sbr.rel (%p119) target = $region12
      $region11: #{j_score_forward.1} parent=5 // pred_region
        %s123 = ssub.s32 %s15, 1
        // Predicated region
        $region13: #{j_score_forward.1} parent=11 // pred_check
          %p124 = pneg %p62
        $region14: #{j_score_forward.1} parent=11 // pred_check_branch
          %126 = sbr.rel (%p124) target = $region16
        $region15: #{j_score_forward.1} parent=11 // pred_region
          _
        $region16: #{j_score_forward.1} parent=11 // pred_fallthru
          _
        // Predicated region
        $region17: #{j_score_forward.1} parent=11 // pred_check
          %p127 = pneg %p83
        $region18: #{j_score_forward.1} parent=11 // pred_check_branch
          %129 = sbr.rel (%p127) target = $region20
        $region19: #{j_score_forward.1} parent=11 // pred_region
          _
        $region20: #{j_score_forward.1} parent=11 // pred_fallthru
          _
      $region12: #{j_score_forward.1} parent=5 // pred_fallthru
        _
      %p130 = scmp.lt.s32.totalorder %s15, 2
      // Predicated region
      $region21: #{j_score_forward.1} parent=5 // pred_check
        %p131 = pneg %p130
      $region22: #{j_score_forward.1} parent=5 // pred_check_branch
        %133 = sbr.rel (%p131) target = $region24
      $region23: #{j_score_forward.1} parent=5 // pred_region
        // Predicated region
        $region25: #{j_score_forward.1} parent=23 // pred_check
          %p134 = pneg %p35
        $region26: #{j_score_forward.1} parent=23 // pred_check_branch
          %136 = sbr.rel (%p134) target = $region28
        $region27: #{j_score_forward.1} parent=23 // pred_region
          %s137 = sand.u32 %s25, 1
          %s138 = scalar_lea.sflag [#allocation3], %s137
          %s139 = sand.u32 %s25, 1
          %s140 = smul.addr %s139, 512
          %s141 = scalar_lea.vmem [#allocation2], %s140
          %s142 = smul.u32 32, %s15
          %s144 = ssub.s32 8192, 8192
          %145 = vsyncadd %s138, %s144
          %s146 = smul.addr %s142, 2
          %s147 = smul.addr %s146, 128
          %s148 = scalar_lea.hbm %s0, %s147
          %s149 = sshll.u32 %s141, 4
          %s150 = int_to_ptr.vmem [resolvable:$true] %s149
          %155 = dma.hbm_to_vmem [thread:$0]  %s148, 8192, %s150, %s138, 256, 256, 16
        $region28: #{j_score_forward.1} parent=23 // pred_fallthru
          _
      $region24: #{j_score_forward.1} parent=5 // pred_fallthru
        _
      %p156 = scmp.le.s32.totalorder 1, %s15
      %p157 = scmp.lt.s32.totalorder %s15, 3
      %p158 = pnand %p156, %p157
      %p159 = pneg %p158
      // Predicated region
      $region29: #{j_score_forward.1} parent=5 // pred_check
        _
      $region30: #{j_score_forward.1} parent=5 // pred_check_branch
        %161 = sbr.rel (%p158) target = $region32
      $region31: #{j_score_forward.1} parent=5 // pred_region
        %s162 = ssub.s32 %s15, 1
        %s163 = sand.u32 %s28, 1
        %s164 = scalar_lea.sflag [#allocation3], %s163
        %s165 = sand.u32 %s28, 1
        %s166 = smul.addr %s165, 512
        %s167 = scalar_lea.vmem [#allocation2], %s166
        // Predicated region
        $region33: #{j_score_forward.1} parent=31 // pred_check
          %p168 = pneg %p41
        $region34: #{j_score_forward.1} parent=31 // pred_check_branch
          %170 = sbr.rel (%p168) target = $region36
        $region35: #{j_score_forward.1} parent=31 // pred_region
          %171 = dma.done %s164, 8192
        $region36: #{j_score_forward.1} parent=31 // pred_fallthru
          _
        %s172 = sand.u32 %s28, 1
        %s173 = scalar_lea.sflag [#allocation3], %s172
        %s174 = sand.u32 %s28, 1
        %s175 = smul.addr %s174, 512
        %s176 = scalar_lea.vmem [#allocation2], %s175
        %p177 = pneg %p41
        %p178 = pneg %p38
        %p179 = pneg %p62
        %p180 = pneg %p59
        %p181 = pneg %p83
        %p182 = pneg %p80
        %p183 = pneg %p109
        %p184 = pneg %p106
        %s185 = sand.u32 %s96, 1
        %s186 = scalar_lea.sflag [#allocation4], %s185
        %s187 = sand.u32 %s96, 1
        %s188 = smul.addr %s187, 256
        %s189 = scalar_lea.vmem [#allocation5], %s188
        %s190 = smul.u32 32, %s20
        %s191 = smul.u32 32, %s20
        %v193 = vld [vmem:[%s167] sm:$0xff]
        %v194 = vld [vmem:[%s167 + $0x8] sm:$0xff]
        %v195 = vld [vmem:[%s167 + $0x10] sm:$0xff]
        %v196 = vld [vmem:[%s167 + $0x18] sm:$0xff]
        %v197 = vld [vmem:[%s167 + $0x20] sm:$0xff]
        %v198 = vld [vmem:[%s167 + $0x28] sm:$0xff]
        %v199 = vld [vmem:[%s167 + $0x30] sm:$0xff]
        %v200 = vld [vmem:[%s167 + $0x38] sm:$0xff]
        %v201 = vld [vmem:[%s167 + $0x40] sm:$0xff]
        %v202 = vld [vmem:[%s167 + $0x48] sm:$0xff]
        %v203 = vld [vmem:[%s167 + $0x50] sm:$0xff]
        %v204 = vld [vmem:[%s167 + $0x58] sm:$0xff]
        %v205 = vld [vmem:[%s167 + $0x60] sm:$0xff]
        %v206 = vld [vmem:[%s167 + $0x68] sm:$0xff]
        %v207 = vld [vmem:[%s167 + $0x70] sm:$0xff]
        %v208 = vld [vmem:[%s167 + $0x78] sm:$0xff]
        %v209 = vld [vmem:[%s167 + $0x80] sm:$0xff]
        %v210 = vld [vmem:[%s167 + $0x88] sm:$0xff]
        %v211 = vld [vmem:[%s167 + $0x90] sm:$0xff]
        %v212 = vld [vmem:[%s167 + $0x98] sm:$0xff]
        %v213 = vld [vmem:[%s167 + $0xa0] sm:$0xff]
        %v214 = vld [vmem:[%s167 + $0xa8] sm:$0xff]
        %v215 = vld [vmem:[%s167 + $0xb0] sm:$0xff]
        %v216 = vld [vmem:[%s167 + $0xb8] sm:$0xff]
        %v217 = vld [vmem:[%s167 + $0xc0] sm:$0xff]
        %v218 = vld [vmem:[%s167 + $0xc8] sm:$0xff]
        %v219 = vld [vmem:[%s167 + $0xd0] sm:$0xff]
        %v220 = vld [vmem:[%s167 + $0xd8] sm:$0xff]
        %v221 = vld [vmem:[%s167 + $0xe0] sm:$0xff]
        %v222 = vld [vmem:[%s167 + $0xe8] sm:$0xff]
        %v223 = vld [vmem:[%s167 + $0xf0] sm:$0xff]
        %v224 = vld [vmem:[%s167 + $0xf8] sm:$0xff]
        %v225 = vld [vmem:[%s167 + $0x100] sm:$0xff]
        %v226 = vld [vmem:[%s167 + $0x108] sm:$0xff]
        %v227 = vld [vmem:[%s167 + $0x110] sm:$0xff]
        %v228 = vld [vmem:[%s167 + $0x118] sm:$0xff]
        %v229 = vld [vmem:[%s167 + $0x120] sm:$0xff]
        %v230 = vld [vmem:[%s167 + $0x128] sm:$0xff]
        %v231 = vld [vmem:[%s167 + $0x130] sm:$0xff]
        %v232 = vld [vmem:[%s167 + $0x138] sm:$0xff]
        %v233 = vld [vmem:[%s167 + $0x140] sm:$0xff]
        %v234 = vld [vmem:[%s167 + $0x148] sm:$0xff]
        %v235 = vld [vmem:[%s167 + $0x150] sm:$0xff]
        %v236 = vld [vmem:[%s167 + $0x158] sm:$0xff]
        %v237 = vld [vmem:[%s167 + $0x160] sm:$0xff]
        %v238 = vld [vmem:[%s167 + $0x168] sm:$0xff]
        %v239 = vld [vmem:[%s167 + $0x170] sm:$0xff]
        %v240 = vld [vmem:[%s167 + $0x178] sm:$0xff]
        %v241 = vld [vmem:[%s167 + $0x180] sm:$0xff]
        %v242 = vld [vmem:[%s167 + $0x188] sm:$0xff]
        %v243 = vld [vmem:[%s167 + $0x190] sm:$0xff]
        %v244 = vld [vmem:[%s167 + $0x198] sm:$0xff]
        %v245 = vld [vmem:[%s167 + $0x1a0] sm:$0xff]
        %v246 = vld [vmem:[%s167 + $0x1a8] sm:$0xff]
        %v247 = vld [vmem:[%s167 + $0x1b0] sm:$0xff]
        %v248 = vld [vmem:[%s167 + $0x1b8] sm:$0xff]
        %v249 = vld [vmem:[%s167 + $0x1c0] sm:$0xff]
        %v250 = vld [vmem:[%s167 + $0x1c8] sm:$0xff]
        %v251 = vld [vmem:[%s167 + $0x1d0] sm:$0xff]
        %v252 = vld [vmem:[%s167 + $0x1d8] sm:$0xff]
        %v253 = vld [vmem:[%s167 + $0x1e0] sm:$0xff]
        %v254 = vld [vmem:[%s167 + $0x1e8] sm:$0xff]
        %v255 = vld [vmem:[%s167 + $0x1f0] sm:$0xff]
        %v256 = vld [vmem:[%s167 + $0x1f8] sm:$0xff]
        %v257 = vpack.c.bf16 %v195, %v193
        %v258 = vpack.c.bf16 %v196, %v194
        %v259 = vpack.c.bf16 %v199, %v197
        %v260 = vpack.c.bf16 %v200, %v198
        %v261 = vpack.c.bf16 %v203, %v201
        %v262 = vpack.c.bf16 %v204, %v202
        %v263 = vpack.c.bf16 %v207, %v205
        %v264 = vpack.c.bf16 %v208, %v206
        %v265 = vpack.c.bf16 %v211, %v209
        %v266 = vpack.c.bf16 %v212, %v210
        %v267 = vpack.c.bf16 %v215, %v213
        %v268 = vpack.c.bf16 %v216, %v214
        %v269 = vpack.c.bf16 %v219, %v217
        %v270 = vpack.c.bf16 %v220, %v218
        %v271 = vpack.c.bf16 %v223, %v221
        %v272 = vpack.c.bf16 %v224, %v222
        %v273 = vpack.c.bf16 %v227, %v225
        %v274 = vpack.c.bf16 %v228, %v226
        %v275 = vpack.c.bf16 %v231, %v229
        %v276 = vpack.c.bf16 %v232, %v230
        %v277 = vpack.c.bf16 %v235, %v233
        %v278 = vpack.c.bf16 %v236, %v234
        %v279 = vpack.c.bf16 %v239, %v237
        %v280 = vpack.c.bf16 %v240, %v238
        %v281 = vpack.c.bf16 %v243, %v241
        %v282 = vpack.c.bf16 %v244, %v242
        %v283 = vpack.c.bf16 %v247, %v245
        %v284 = vpack.c.bf16 %v248, %v246
        %v285 = vpack.c.bf16 %v251, %v249
        %v286 = vpack.c.bf16 %v252, %v250
        %v287 = vpack.c.bf16 %v255, %v253
        %v288 = vpack.c.bf16 %v256, %v254
        %v289 = vld [vmem:[%s1] sm:$0xff]
        %v290 = vld [vmem:[%s1 + $0x8] sm:$0xff]
        %v291 = vld [vmem:[%s1 + $0x10] sm:$0xff]
        %v292 = vld [vmem:[%s1 + $0x18] sm:$0xff]
        %v293 = vld [vmem:[%s1 + $0x20] sm:$0xff]
        %v294 = vld [vmem:[%s1 + $0x28] sm:$0xff]
        %v295 = vld [vmem:[%s1 + $0x30] sm:$0xff]
        %v296 = vld [vmem:[%s1 + $0x38] sm:$0xff]
        %v297 = vld [vmem:[%s1 + $0x40] sm:$0xff]
        %v298 = vld [vmem:[%s1 + $0x48] sm:$0xff]
        %v299 = vld [vmem:[%s1 + $0x50] sm:$0xff]
        %v300 = vld [vmem:[%s1 + $0x58] sm:$0xff]
        %v301 = vld [vmem:[%s1 + $0x60] sm:$0xff]
        %v302 = vld [vmem:[%s1 + $0x68] sm:$0xff]
        %v303 = vld [vmem:[%s1 + $0x70] sm:$0xff]
        %v304 = vld [vmem:[%s1 + $0x78] sm:$0xff]
        %v305 = vld [vmem:[%s2] sm:$0x1]
        %v307 = vlaneseq
        %v308 = vshrl.u32 %v307, 7
        %v309 = vsub.s32 0, %v308
        %v310 = vrot.slane %v305, %v309
        %v328 = vunpack.c.l.b16 %v289
        %v329 = vunpack.c.h.b16 %v289
        %v330 = vunpack.c.l.b16 %v290
        %v331 = vunpack.c.h.b16 %v290
        %v332 = vunpack.c.l.b16 %v291
        %v333 = vunpack.c.h.b16 %v291
        %v334 = vunpack.c.l.b16 %v292
        %v335 = vunpack.c.h.b16 %v292
        %v336 = vunpack.c.l.b16 %v293
        %v337 = vunpack.c.h.b16 %v293
        %v338 = vunpack.c.l.b16 %v294
        %v339 = vunpack.c.h.b16 %v294
        %v340 = vunpack.c.l.b16 %v295
        %v341 = vunpack.c.h.b16 %v295
        %v342 = vunpack.c.l.b16 %v296
        %v343 = vunpack.c.h.b16 %v296
        %v344 = vunpack.c.l.b16 %v297
        %v345 = vunpack.c.h.b16 %v297
        %v346 = vunpack.c.l.b16 %v298
        %v347 = vunpack.c.h.b16 %v298
        %v348 = vunpack.c.l.b16 %v299
        %v349 = vunpack.c.h.b16 %v299
        %v350 = vunpack.c.l.b16 %v300
        %v351 = vunpack.c.h.b16 %v300
        %v352 = vunpack.c.l.b16 %v301
        %v353 = vunpack.c.h.b16 %v301
        %v354 = vunpack.c.l.b16 %v302
        %v355 = vunpack.c.h.b16 %v302
        %v356 = vunpack.c.l.b16 %v303
        %v357 = vunpack.c.h.b16 %v303
        %v358 = vunpack.c.l.b16 %v304
        %v359 = vunpack.c.h.b16 %v304
        %v360 = vpack.c.b16 %v330, %v328
        %v361 = vpack.c.b16 %v331, %v329
        %v362 = vpack.c.b16 %v334, %v332
        %v363 = vpack.c.b16 %v335, %v333
        %v364 = vpack.c.b16 %v338, %v336
        %v365 = vpack.c.b16 %v339, %v337
        %v366 = vpack.c.b16 %v342, %v340
        %v367 = vpack.c.b16 %v343, %v341
        %v368 = vpack.c.b16 %v346, %v344
        %v369 = vpack.c.b16 %v347, %v345
        %v370 = vpack.c.b16 %v350, %v348
        %v371 = vpack.c.b16 %v351, %v349
        %v372 = vpack.c.b16 %v354, %v352
        %v373 = vpack.c.b16 %v355, %v353
        %v374 = vpack.c.b16 %v358, %v356
        %v375 = vpack.c.b16 %v359, %v357
        %392 = vmatprep.subr.bf16.mxu0 %v361
        %393 = vmatpush1.bf16.xpose.msra.mxu0 %v360
        %394 = vmatprep.subr.bf16.mxu0 %v363
        %395 = vmatpush1.bf16.xpose.msra.mxu0 %v362
        %396 = vmatprep.subr.bf16.mxu0 %v365
        %397 = vmatpush1.bf16.xpose.msra.mxu0 %v364
        %398 = vmatprep.subr.bf16.mxu0 %v367
        %399 = vmatpush1.bf16.xpose.msra.mxu0 %v366
        %400 = vmatprep.subr.bf16.mxu0 %v369
        %401 = vmatpush1.bf16.xpose.msra.mxu0 %v368
        %402 = vmatprep.subr.bf16.mxu0 %v371
        %403 = vmatpush1.bf16.xpose.msra.mxu0 %v370
        %404 = vmatprep.subr.bf16.mxu0 %v373
        %405 = vmatpush1.bf16.xpose.msra.mxu0 %v372
        %406 = vmatprep.subr.bf16.mxu0 %v375
        %407 = vmatpush1.bf16.xpose.msra.mxu0 %v374
        %408 = vmatprep.subr.bf16.mxu0 0
        %409 = vmatpush1.bf16.xpose.msra.mxu0 0
        %410 = vmatprep.subr.bf16.mxu0 0
        %411 = vmatpush1.bf16.xpose.msra.mxu0 0
        %412 = vmatprep.subr.bf16.mxu0 0
        %413 = vmatpush1.bf16.xpose.msra.mxu0 0
        %414 = vmatprep.subr.bf16.mxu0 0
        %415 = vmatpush1.bf16.xpose.msra.mxu0 0
        %416 = vmatprep.subr.bf16.mxu0 0
        %417 = vmatpush1.bf16.xpose.msra.mxu0 0
        %418 = vmatprep.subr.bf16.mxu0 0
        %419 = vmatpush1.bf16.xpose.msra.mxu0 0
        %420 = vmatprep.subr.bf16.mxu0 0
        %421 = vmatpush1.bf16.xpose.msra.mxu0 0
        %422 = vmatprep.subr.bf16.mxu0 0
        %423 = vmatpush1.bf16.xpose.msra.mxu0 0
        %424 = vmatprep.mubr.bf16.mxu0 %v258
        %425 = vmatmul.mubr.bf16.gmra.mrb[0].mxu0 %v257
        %v426 = vpop.f32.mrb[0].mxu0
        %v427 = vadd.f32 %v310, %v426
        %v428 = vpop.f32.mrb[0].mxu0
        %v429 = vpop.f32.mrb[0].mxu0
        %v430 = vadd.f32 %v310, %v429
        %v431 = vpop.f32.mrb[0].mxu0
        %432 = vmatprep.mubr.bf16.mxu0 %v260
        %433 = vmatmul.mubr.bf16.gmra.mrb[0].mxu0 %v259
        %v434 = vpop.f32.mrb[0].mxu0
        %v435 = vadd.f32 %v310, %v434
        %v436 = vpop.f32.mrb[0].mxu0
        %v437 = vpop.f32.mrb[0].mxu0
        %v438 = vadd.f32 %v310, %v437
        %v439 = vpop.f32.mrb[0].mxu0
        %440 = vmatprep.mubr.bf16.mxu0 %v262
        %441 = vmatmul.mubr.bf16.gmra.mrb[0].mxu0 %v261
        %v442 = vpop.f32.mrb[0].mxu0
        %v443 = vadd.f32 %v310, %v442
        %v444 = vpop.f32.mrb[0].mxu0
        %v445 = vpop.f32.mrb[0].mxu0
        %v446 = vadd.f32 %v310, %v445
        %v447 = vpop.f32.mrb[0].mxu0
        %448 = vmatprep.mubr.bf16.mxu0 %v264
        %449 = vmatmul.mubr.bf16.gmra.mrb[0].mxu0 %v263
        %v450 = vpop.f32.mrb[0].mxu0
        %v451 = vadd.f32 %v310, %v450
        %v452 = vpop.f32.mrb[0].mxu0
        %v453 = vpop.f32.mrb[0].mxu0
        %v454 = vadd.f32 %v310, %v453
        %v455 = vpop.f32.mrb[0].mxu0
        %456 = vmatprep.mubr.bf16.mxu0 %v266
        %457 = vmatmul.mubr.bf16.gmra.mrb[0].mxu0 %v265
        %v458 = vpop.f32.mrb[0].mxu0
        %v459 = vadd.f32 %v310, %v458
        %v460 = vpop.f32.mrb[0].mxu0
        %v461 = vpop.f32.mrb[0].mxu0
        %v462 = vadd.f32 %v310, %v461
        %v463 = vpop.f32.mrb[0].mxu0
        %464 = vmatprep.mubr.bf16.mxu0 %v268
        %465 = vmatmul.mubr.bf16.gmra.mrb[0].mxu0 %v267
        %v466 = vpop.f32.mrb[0].mxu0
        %v467 = vadd.f32 %v310, %v466
        %v468 = vpop.f32.mrb[0].mxu0
        %v469 = vpop.f32.mrb[0].mxu0
        %v470 = vadd.f32 %v310, %v469
        %v471 = vpop.f32.mrb[0].mxu0
        %472 = vmatprep.mubr.bf16.mxu0 %v270
        %473 = vmatmul.mubr.bf16.gmra.mrb[0].mxu0 %v269
        %v474 = vpop.f32.mrb[0].mxu0
        %v475 = vadd.f32 %v310, %v474
        %v476 = vpop.f32.mrb[0].mxu0
        %v477 = vpop.f32.mrb[0].mxu0
        %v478 = vadd.f32 %v310, %v477
        %v479 = vpop.f32.mrb[0].mxu0
        %480 = vmatprep.mubr.bf16.mxu0 %v272
        %481 = vmatmul.mubr.bf16.gmra.mrb[0].mxu0 %v271
        %v482 = vpop.f32.mrb[0].mxu0
        %v483 = vadd.f32 %v310, %v482
        %v484 = vpop.f32.mrb[0].mxu0
        %v485 = vpop.f32.mrb[0].mxu0
        %v486 = vadd.f32 %v310, %v485
        %v487 = vpop.f32.mrb[0].mxu0
        %488 = vmatprep.mubr.bf16.mxu0 %v274
        %489 = vmatmul.mubr.bf16.gmra.mrb[0].mxu0 %v273
        %v490 = vpop.f32.mrb[0].mxu0
        %v491 = vadd.f32 %v310, %v490
        %v492 = vpop.f32.mrb[0].mxu0
        %v493 = vpop.f32.mrb[0].mxu0
        %v494 = vadd.f32 %v310, %v493
        %v495 = vpop.f32.mrb[0].mxu0
        %496 = vmatprep.mubr.bf16.mxu0 %v276
        %497 = vmatmul.mubr.bf16.gmra.mrb[0].mxu0 %v275
        %v498 = vpop.f32.mrb[0].mxu0
        %v499 = vadd.f32 %v310, %v498
        %v500 = vpop.f32.mrb[0].mxu0
        %v501 = vpop.f32.mrb[0].mxu0
        %v502 = vadd.f32 %v310, %v501
        %v503 = vpop.f32.mrb[0].mxu0
        %504 = vmatprep.mubr.bf16.mxu0 %v278
        %505 = vmatmul.mubr.bf16.gmra.mrb[0].mxu0 %v277
        %v506 = vpop.f32.mrb[0].mxu0
        %v507 = vadd.f32 %v310, %v506
        %v508 = vpop.f32.mrb[0].mxu0
        %v509 = vpop.f32.mrb[0].mxu0
        %v510 = vadd.f32 %v310, %v509
        %v511 = vpop.f32.mrb[0].mxu0
        %512 = vmatprep.mubr.bf16.mxu0 %v280
        %513 = vmatmul.mubr.bf16.gmra.mrb[0].mxu0 %v279
        %v514 = vpop.f32.mrb[0].mxu0
        %v515 = vadd.f32 %v310, %v514
        %v516 = vpop.f32.mrb[0].mxu0
        %v517 = vpop.f32.mrb[0].mxu0
        %v518 = vadd.f32 %v310, %v517
        %v519 = vpop.f32.mrb[0].mxu0
        %520 = vmatprep.mubr.bf16.mxu0 %v282
        %521 = vmatmul.mubr.bf16.gmra.mrb[0].mxu0 %v281
        %v522 = vpop.f32.mrb[0].mxu0
        %v523 = vadd.f32 %v310, %v522
        %v524 = vpop.f32.mrb[0].mxu0
        %v525 = vpop.f32.mrb[0].mxu0
        %v526 = vadd.f32 %v310, %v525
        %v527 = vpop.f32.mrb[0].mxu0
        %528 = vmatprep.mubr.bf16.mxu0 %v284
        %529 = vmatmul.mubr.bf16.gmra.mrb[0].mxu0 %v283
        %v530 = vpop.f32.mrb[0].mxu0
        %v531 = vadd.f32 %v310, %v530
        %v532 = vpop.f32.mrb[0].mxu0
        %v533 = vpop.f32.mrb[0].mxu0
        %v534 = vadd.f32 %v310, %v533
        %v535 = vpop.f32.mrb[0].mxu0
        %536 = vmatprep.mubr.bf16.mxu0 %v286
        %537 = vmatmul.mubr.bf16.gmra.mrb[0].mxu0 %v285
        %v538 = vpop.f32.mrb[0].mxu0
        %v539 = vadd.f32 %v310, %v538
        %v540 = vpop.f32.mrb[0].mxu0
        %v541 = vpop.f32.mrb[0].mxu0
        %v542 = vadd.f32 %v310, %v541
        %v543 = vpop.f32.mrb[0].mxu0
        %544 = vmatprep.mubr.bf16.mxu0 %v288
        %545 = vmatmul.mubr.bf16.gmra.mrb[0].mxu0 %v287
        %v546 = vpop.f32.mrb[0].mxu0
        %v547 = vadd.f32 %v310, %v546
        %v548 = vpop.f32.mrb[0].mxu0
        %v549 = vpop.f32.mrb[0].mxu0
        %v550 = vadd.f32 %v310, %v549
        %v551 = vpop.f32.mrb[0].mxu0
        %552 = vdwg.mxu0
        %553 = vst [vmem:[%s189] sm:$0xff] %v427
        %554 = vst [vmem:[%s189 + $0x8] sm:$0xff] %v430
        %555 = vst [vmem:[%s189 + $0x10] sm:$0xff] %v435
        %556 = vst [vmem:[%s189 + $0x18] sm:$0xff] %v438
        %557 = vst [vmem:[%s189 + $0x20] sm:$0xff] %v443
        %558 = vst [vmem:[%s189 + $0x28] sm:$0xff] %v446
        %559 = vst [vmem:[%s189 + $0x30] sm:$0xff] %v451
        %560 = vst [vmem:[%s189 + $0x38] sm:$0xff] %v454
        %561 = vst [vmem:[%s189 + $0x40] sm:$0xff] %v459
        %562 = vst [vmem:[%s189 + $0x48] sm:$0xff] %v462
        %563 = vst [vmem:[%s189 + $0x50] sm:$0xff] %v467
        %564 = vst [vmem:[%s189 + $0x58] sm:$0xff] %v470
        %565 = vst [vmem:[%s189 + $0x60] sm:$0xff] %v475
        %566 = vst [vmem:[%s189 + $0x68] sm:$0xff] %v478
        %567 = vst [vmem:[%s189 + $0x70] sm:$0xff] %v483
        %568 = vst [vmem:[%s189 + $0x78] sm:$0xff] %v486
        %569 = vst [vmem:[%s189 + $0x80] sm:$0xff] %v491
        %570 = vst [vmem:[%s189 + $0x88] sm:$0xff] %v494
        %571 = vst [vmem:[%s189 + $0x90] sm:$0xff] %v499
        %572 = vst [vmem:[%s189 + $0x98] sm:$0xff] %v502
        %573 = vst [vmem:[%s189 + $0xa0] sm:$0xff] %v507
        %574 = vst [vmem:[%s189 + $0xa8] sm:$0xff] %v510
        %575 = vst [vmem:[%s189 + $0xb0] sm:$0xff] %v515
        %576 = vst [vmem:[%s189 + $0xb8] sm:$0xff] %v518
        %577 = vst [vmem:[%s189 + $0xc0] sm:$0xff] %v523
        %578 = vst [vmem:[%s189 + $0xc8] sm:$0xff] %v526
        %579 = vst [vmem:[%s189 + $0xd0] sm:$0xff] %v531
        %580 = vst [vmem:[%s189 + $0xd8] sm:$0xff] %v534
        %581 = vst [vmem:[%s189 + $0xe0] sm:$0xff] %v539
        %582 = vst [vmem:[%s189 + $0xe8] sm:$0xff] %v542
        %583 = vst [vmem:[%s189 + $0xf0] sm:$0xff] %v547
        %584 = vst [vmem:[%s189 + $0xf8] sm:$0xff] %v550
        %s585 = sand.u32 %s96, 1
        %s586 = scalar_lea.sflag [#allocation4], %s585
        %s587 = sand.u32 %s96, 1
        %s588 = smul.addr %s587, 256
        %s589 = scalar_lea.vmem [#allocation5], %s588
        // Predicated region
        $region37: #{j_score_forward.1} parent=31 // pred_check
          %p590 = pneg %p106
        $region38: #{j_score_forward.1} parent=31 // pred_check_branch
          %592 = sbr.rel (%p590) target = $region40
        $region39: #{j_score_forward.1} parent=31 // pred_region
          %s593 = smul.u32 32, %s20
          %s595 = ssub.s32 4096, 4096
          %596 = vsyncadd %s586, %s595
          %s597 = smul.addr %s593, 128
          %s598 = scalar_lea.hbm %s3, %s597
          %s599 = sshll.u32 %s589, 4
          %s600 = int_to_ptr.vmem [resolvable:$true] %s599
          %605 = dma.vmem_to_hbm [thread:$0]  %s600, 4096, %s598, %s586, 128, 128, 8
        $region40: #{j_score_forward.1} parent=31 // pred_fallthru
          _
      $region32: #{j_score_forward.1} parent=5 // pred_fallthru
        _
      %p606 = scmp.le.s32.totalorder 2, %s15
      // Predicated region
      $region41: #{j_score_forward.1} parent=5 // pred_check
        %p607 = pneg %p606
      $region42: #{j_score_forward.1} parent=5 // pred_check_branch
        %609 = sbr.rel (%p607) target = $region44
      $region43: #{j_score_forward.1} parent=5 // pred_region
        %s610 = ssub.s32 %s15, 2
        // Predicated region
        $region45: #{j_score_forward.1} parent=43 // pred_check
          %p611 = pneg %p112
        $region46: #{j_score_forward.1} parent=43 // pred_check_branch
          %613 = sbr.rel (%p611) target = $region48
        $region47: #{j_score_forward.1} parent=43 // pred_region
          %s614 = sand.u32 %s97, 1
          %s615 = scalar_lea.sflag [#allocation4], %s614
          %s616 = sand.u32 %s97, 1
          %s617 = smul.addr %s616, 256
          %s618 = scalar_lea.vmem [#allocation5], %s617
          %619 = dma.done %s615, 4096
        $region48: #{j_score_forward.1} parent=43 // pred_fallthru
          _
      $region44: #{j_score_forward.1} parent=5 // pred_fallthru
        _
    $region6: #{j_score_forward.1} parent=1 // loop_footer
      %s19 = sadd.s32 1, %s15
    $region7: #{j_score_forward.1} parent=1 // loop_footer_branch
      %14 = sbr.rel target = $region3
    $region8: #{j_score_forward.1} parent=1 // loop_exit
      _
    %620 = vsyncpa [#allocation3], 1
    %s621 = scalar_lea.sflag [#allocation3], 1
    %622 = vsyncpa %s621, 1
    %623 = vsyncpa [#allocation4], 1
    %s624 = scalar_lea.sflag [#allocation4], 1
    %625 = vsyncpa %s624, 1

</llo_original>
